<compile_context>
chip_gen: v5e
topology: v5e:2x2
jax: 0.10.0
libtpu: 0.0.40
codegen_flags: <defaults>
</compile_context>

<pallas_src>
import functools

import jax
import jax.numpy as jnp
from jax import lax
from jax.experimental import pallas as pl
from jax.experimental.pallas import tpu as pltpu


# ---------------------------------------------------------------------------
# Fused kernel: BN1 + ReLU + 1x1 conv + BN2 + ReLU + 3x3 conv (pad=1) + concat
#
#   x_ref : (block_n, Cin, H*W)   images, channels-first, flattened spatial
#   s1/b1 : (Cin, 1)              folded BN1 scale / bias (f32)
#   w1    : (Cmid, Cin)           1x1 conv weight with BN2 scale folded in (bf16)
#   b2    : (Cmid, 1)             folded BN2 bias (f32)
#   w2    : (3*Cout, 3*Cmid)      3x3 weight, row = dh*Cout + o, col = dw*Cmid + ci (bf16)
#   o_ref : (block_n, Cin+Cout, H*W)   channels [0:Cin] = x, [Cin:] = conv out
# ---------------------------------------------------------------------------
def _bottleneck_kernel(x_ref, s1_ref, b1_ref, w1_ref, b2_ref, w2_ref, o_ref,
                       *, H, W, block_n):
    HW = H * W
    Cin = x_ref.shape[1]
    Cout = w2_ref.shape[0] // 3

    # Edge-column masks for the horizontal 3x3 taps (hoisted; computed once).
    col = lax.broadcasted_iota(jnp.int32, (1, HW), 1) % W
    first_col = col == 0
    last_col = col == W - 1
    zrow = jnp.zeros((Cout, W), jnp.float32)

    for b in range(block_n):                       # static unroll over images
        x = x_ref[b]                               # (Cin, HW) f32

        # Pass-through half of torch.cat([x, y], dim=1); issued early so the
        # copy overlaps with the MXU work below.  Cin is sublane-aligned.
        o_ref[b, :Cin, :] = x

        # BN1 + ReLU (f32 VPU math, per-channel scale/bias broadcast on lanes).
        a1 = jnp.maximum(x * s1_ref[...] + b1_ref[...], 0.0)          # (Cin, HW)

        # 1x1 conv (BN2 scale already folded into w1); bf16 MXU, f32 accum.
        y1 = jnp.dot(w1_ref[...], a1.astype(jnp.bfloat16),
                     preferred_element_type=jnp.float32)              # (Cmid, HW)

        # BN2 bias + ReLU.
        a2 = jnp.maximum(y1 + b2_ref[...], 0.0)                       # (Cmid, HW)

        # Horizontal taps via one-lane rolls (XLU) + edge-column masks (VPU).
        left = jnp.where(first_col, 0.0, pltpu.roll(a2, 1, axis=1))        # (h, w-1)
        right = jnp.where(last_col, 0.0, pltpu.roll(a2, HW - 1, axis=1))   # (h, w+1)

        # dw-grouped slab for the MXU: rows [0:Cmid]=left, [Cmid:2Cmid]=center,
        # [2Cmid:3Cmid]=right.  bf16 halves its VMEM footprint.
        v = jnp.concatenate([left, a2, right], axis=0).astype(jnp.bfloat16)

        # 3x3 conv as ONE matmul: (3*Cout, 3*Cmid) @ (3*Cmid, HW).
        p = jnp.dot(w2_ref[...], v, preferred_element_type=jnp.float32)

        # Combine the three kernel-row partials with cheap (Cout, HW) one-row
        # shifts; the zero row blocks implement the top/bottom zero padding.
        p_top = p[:Cout]           # dh = 0  -> contributes to output row h+1
        p_mid = p[Cout:2 * Cout]   # dh = 1
        p_bot = p[2 * Cout:]       # dh = 2  -> contributes to output row h-1
        y2 = (p_mid
              + jnp.concatenate([zrow, p_top[:, :HW - W]], axis=1)
              + jnp.concatenate([p_bot[:, W:], zrow], axis=1))

        o_ref[b, Cin:, :] = y2.astype(o_ref.dtype)


# ---------------------------------------------------------------------------
# Wrapper (NCHW in, NCHW out — no transposes, no HBM round-trip of the
# intermediate activation)
# ---------------------------------------------------------------------------
def bottleneck_forward(x_nchw, params, *, block_n=1, eps=1e-5):
    """x_nchw: (N, Cin, H, W) float32. Returns (N, Cin + growth_rate, H, W)."""
    N, Cin, H, W = x_nchw.shape
    w1_oihw = params["w1"]                       # (Cmid, Cin, 1, 1)
    w2_oihw = params["w2"]                       # (Cout, Cmid, 3, 3)
    Cmid = w1_oihw.shape[0]
    Cout = w2_oihw.shape[0]
    HW = H * W
    assert N % block_n == 0, (N, block_n)

    # Fold BN running stats (inference mode).
    scale1 = (params["gamma1"] / jnp.sqrt(params["var1"] + eps)).astype(jnp.float32)
    bias1 = (params["beta1"] - params["mean1"] * scale1).astype(jnp.float32)
    scale2 = (params["gamma2"] / jnp.sqrt(params["var2"] + eps)).astype(jnp.float32)
    bias2 = (params["beta2"] - params["mean2"] * scale2).astype(jnp.float32)

    # BN2 scale folded into the 1x1 conv weight; MXU operands pre-cast to bf16.
    w1 = (scale2[:, None] * w1_oihw[:, :, 0, 0]).astype(jnp.bfloat16)     # (Cmid, Cin)
    # 3x3 weight as (3*Cout, 3*Cmid): row = dh*Cout + o, col = dw*Cmid + ci.
    w2 = jnp.transpose(w2_oihw, (2, 0, 3, 1)).reshape(
        3 * Cout, 3 * Cmid).astype(jnp.bfloat16)

    x3 = x_nchw.reshape(N, Cin, HW).astype(jnp.float32)    # free view, no copy

    kernel = functools.partial(_bottleneck_kernel, H=H, W=W, block_n=block_n)

    # VMEM budget from actual block sizes (double-buffered in/out blocks +
    # weights + per-image intermediates) with headroom, instead of hard-coding.
    f32b, bf16b = 4, 2
    blk_in = block_n * Cin * HW * f32b
    blk_out = block_n * (Cin + Cout) * HW * f32b
    wts = Cmid * Cin * bf16b + 3 * Cout * 3 * Cmid * bf16b + (2 * Cin + Cmid) * f32b
    interm = (2 * Cin + 4 * Cmid + 6 * Cout) * HW * f32b + 3 * Cmid * HW * bf16b
    vmem_limit = int(min(100 << 20,
                         max(32 << 20,
                             2 * (blk_in + blk_out) + wts + interm + (8 << 20))))

    out3 = pl.pallas_call(
        kernel,
        out_shape=jax.ShapeDtypeStruct((N, Cin + Cout, HW), jnp.float32),
        grid=(N // block_n,),
        in_specs=[
            pl.BlockSpec((block_n, Cin, HW), lambda n: (n, 0, 0)),
            pl.BlockSpec((Cin, 1), lambda n: (0, 0)),
            pl.BlockSpec((Cin, 1), lambda n: (0, 0)),
            pl.BlockSpec((Cmid, Cin), lambda n: (0, 0)),
            pl.BlockSpec((Cmid, 1), lambda n: (0, 0)),
            pl.BlockSpec((3 * Cout, 3 * Cmid), lambda n: (0, 0)),
        ],
        out_specs=pl.BlockSpec((block_n, Cin + Cout, HW), lambda n: (n, 0, 0)),
        compiler_params=pltpu.CompilerParams(
            dimension_semantics=("parallel",),
            vmem_limit_bytes=vmem_limit,
        ),
    )(x3, scale1.reshape(Cin, 1), bias1.reshape(Cin, 1), w1,
      bias2.reshape(Cmid, 1), w2)

    return out3.reshape(N, Cin + Cout, H, W)


# ---------------------------------------------------------------------------
# Pure-JAX reference (for correctness check)
# ---------------------------------------------------------------------------
def reference_forward(x_nchw, params, eps=1e-5):
    s1 = params["gamma1"] / jnp.sqrt(params["var1"] + eps)
    b1 = params["beta1"] - params["mean1"] * s1
    s2 = params["gamma2"] / jnp.sqrt(params["var2"] + eps)
    b2 = params["beta2"] - params["mean2"] * s2

    a1 = jnp.maximum(x_nchw * s1[None, :, None, None] + b1[None, :, None, None], 0.0)
    y1 = lax.conv_general_dilated(a1, params["w1"], (1, 1), "VALID",
                                  dimension_numbers=("NCHW", "OIHW", "NCHW"))
    a2 = jnp.maximum(y1 * s2[None, :, None, None] + b2[None, :, None, None], 0.0)
    y2 = lax.conv_general_dilated(a2, params["w2"], (1, 1), ((1, 1), (1, 1)),
                                  dimension_numbers=("NCHW", "OIHW", "NCHW"))
    return jnp.concatenate([x_nchw, y2], axis=1)


if __name__ == "__main__":
    # Small deterministic configuration.
    in_channels = 16
    growth_rate = 8
    inner_channel = 4 * growth_rate        # 32
    N, H, W = 4, 16, 16

    key = jax.random.PRNGKey(0)
    keys = jax.random.split(key, 11)

    x = jax.random.normal(keys[0], (N, in_channels, H, W), jnp.float32)

    params = {
        # Conv weights in PyTorch OIHW layout.
        "w1": 0.1 * jax.random.normal(keys[1], (inner_channel, in_channels, 1, 1), jnp.float32),
        "w2": 0.1 * jax.random.normal(keys[2], (growth_rate, inner_channel, 3, 3), jnp.float32),
        # BN1 over in_channels (running stats, inference mode).
        "gamma1": 1.0 + 0.1 * jax.random.normal(keys[3], (in_channels,), jnp.float32),
        "beta1": 0.1 * jax.random.normal(keys[4], (in_channels,), jnp.float32),
        "mean1": 0.1 * jax.random.normal(keys[5], (in_channels,), jnp.float32),
        "var1": jnp.abs(1.0 + 0.1 * jax.random.normal(keys[6], (in_channels,), jnp.float32)),
        # BN2 over inner_channel.
        "gamma2": 1.0 + 0.1 * jax.random.normal(keys[7], (inner_channel,), jnp.float32),
        "beta2": 0.1 * jax.random.normal(keys[8], (inner_channel,), jnp.float32),
        "mean2": 0.1 * jax.random.normal(keys[9], (inner_channel,), jnp.float32),
        "var2": jnp.abs(1.0 + 0.1 * jax.random.normal(keys[10], (inner_channel,), jnp.float32)),
    }

    # Two images per grid step -> grid=(2,), one step per TensorCore on v7x.
    out = jax.block_until_ready(bottleneck_forward(x, params, block_n=2))
    assert out.shape == (N, in_channels + growth_rate, H, W), out.shape

    ref = jax.block_until_ready(reference_forward(x, params))
    # bf16 MXU operands (f32 accumulation) -> relaxed tolerance vs f32 reference.
    max_err = float(jnp.max(jnp.abs(out - ref)))
    assert jnp.allclose(out, ref, atol=5e-2, rtol=5e-2), max_err

    print("KERNEL_OK")
</pallas_src>

<mosaic_0001>
module attributes {stable_mosaic.version = 11 : i64} {
  func.func @_bottleneck_kernel(%arg0: i32, %arg1: memref<2x16x256xf32, #tpu.memory_space<vmem>>, %arg2: memref<16x1xf32, #tpu.memory_space<vmem>>, %arg3: memref<16x1xf32, #tpu.memory_space<vmem>>, %arg4: memref<32x16xbf16, #tpu.memory_space<vmem>>, %arg5: memref<32x1xf32, #tpu.memory_space<vmem>>, %arg6: memref<24x96xbf16, #tpu.memory_space<vmem>>, %arg7: memref<2x24x256xf32, #tpu.memory_space<vmem>>) attributes {dimension_semantics = [#tpu.dimension_semantics<parallel>], iteration_bounds = array<i64: 2>, scalar_prefetch = 0 : i64, scratch_operands = 0 : i64, tpu.core_type = #tpu.core_type<tc>, window_params = [{transform_indices = @transform_0, window_bounds = array<i64: 2, 16, 256>}, {pipeline_mode = #tpu.pipeline_mode<synchronous>, transform_indices = @transform_1, window_bounds = array<i64: 16, 1>}, {pipeline_mode = #tpu.pipeline_mode<synchronous>, transform_indices = @transform_2, window_bounds = array<i64: 16, 1>}, {pipeline_mode = #tpu.pipeline_mode<synchronous>, transform_indices = @transform_3, window_bounds = array<i64: 32, 16>}, {pipeline_mode = #tpu.pipeline_mode<synchronous>, transform_indices = @transform_4, window_bounds = array<i64: 32, 1>}, {pipeline_mode = #tpu.pipeline_mode<synchronous>, transform_indices = @transform_5, window_bounds = array<i64: 24, 96>}, {transform_indices = @transform_6, window_bounds = array<i64: 2, 24, 256>}]} {
    %0 = tpu.iota {dimensions = array<i32: 1>} : vector<1x256xi32>
    %c16_i32 = arith.constant 16 : i32
    %c0_i32 = arith.constant 0 : i32
    %1 = arith.cmpi eq, %c16_i32, %c0_i32 : i32
    %c1_i32 = arith.constant 1 : i32
    %2 = arith.select %1, %c1_i32, %c16_i32 : i32
    %3 = vector.broadcast %2 : i32 to vector<1x256xi32>
    %4 = arith.remsi %0, %3 : vector<1x256xi32>
    %c0_i32_0 = arith.constant 0 : i32
    %5 = vector.broadcast %c0_i32_0 : i32 to vector<1x256xi32>
    %6 = arith.cmpi ne, %4, %5 : vector<1x256xi32>
    %c0_i32_1 = arith.constant 0 : i32
    %7 = vector.broadcast %c0_i32_1 : i32 to vector<1x256xi32>
    %8 = arith.cmpi slt, %4, %7 : vector<1x256xi32>
    %c0_i32_2 = arith.constant 0 : i32
    %9 = arith.cmpi slt, %2, %c0_i32_2 : i32
    %10 = vector.broadcast %9 : i1 to vector<1x256xi1>
    %11 = vector.broadcast %10 : vector<1x256xi1> to vector<1x256xi1>
    %12 = arith.xori %8, %11 : vector<1x256xi1>
    %13 = arith.andi %12, %6 : vector<1x256xi1>
    %14 = vector.broadcast %2 : i32 to vector<1x256xi32>
    %15 = arith.addi %4, %14 : vector<1x256xi32>
    %16 = arith.select %13, %15, %4 : vector<1x256xi1>, vector<1x256xi32>
    %c0_i32_3 = arith.constant 0 : i32
    %17 = vector.broadcast %c0_i32_3 : i32 to vector<1x256xi32>
    %18 = arith.cmpi eq, %16, %17 : vector<1x256xi32>
    %c15_i32 = arith.constant 15 : i32
    %19 = vector.broadcast %c15_i32 : i32 to vector<1x256xi32>
    %20 = arith.cmpi eq, %16, %19 : vector<1x256xi32>
    %cst = arith.constant 0.000000e+00 : f32
    %21 = vector.broadcast %cst : f32 to vector<8x16xf32>
    %c0 = arith.constant 0 : index
    %c0_4 = arith.constant 0 : index
    %c0_5 = arith.constant 0 : index
    %22 = vector.load %arg1[%c0, %c0_4, %c0_5] : memref<2x16x256xf32, #tpu.memory_space<vmem>>, vector<1x16x256xf32>
    %23 = vector.shape_cast %22 : vector<1x16x256xf32> to vector<16x256xf32>
    %c0_6 = arith.constant 0 : index
    %c0_7 = arith.constant 0 : index
    %c0_8 = arith.constant 0 : index
    %24 = vector.load %arg7[%c0_6, %c0_7, %c0_8] : memref<2x24x256xf32, #tpu.memory_space<vmem>>, vector<1x16x256xf32>
    %25 = vector.shape_cast %24 : vector<1x16x256xf32> to vector<16x256xf32>
    %26 = vector.shape_cast %23 : vector<16x256xf32> to vector<1x16x256xf32>
    tpu.vector_store %arg7[%c0_6, %c0_7, %c0_8], %26 {strides = array<i32>} : memref<2x24x256xf32, #tpu.memory_space<vmem>>, vector<1x16x256xf32>,
    %c0_9 = arith.constant 0 : index
    %c0_10 = arith.constant 0 : index
    %27 = vector.load %arg2[%c0_9, %c0_10] : memref<16x1xf32, #tpu.memory_space<vmem>>, vector<16x1xf32>
    %28 = vector.broadcast %27 : vector<16x1xf32> to vector<16x256xf32>
    %29 = arith.mulf %23, %28 : vector<16x256xf32>
    %c0_11 = arith.constant 0 : index
    %c0_12 = arith.constant 0 : index
    %30 = vector.load %arg3[%c0_11, %c0_12] : memref<16x1xf32, #tpu.memory_space<vmem>>, vector<16x1xf32>
    %31 = vector.broadcast %30 : vector<16x1xf32> to vector<16x256xf32>
    %32 = arith.addf %29, %31 : vector<16x256xf32>
    %cst_13 = arith.constant 0.000000e+00 : f32
    %33 = vector.broadcast %cst_13 : f32 to vector<16x256xf32>
    %34 = arith.maximumf %32, %33 : vector<16x256xf32>
    %c0_14 = arith.constant 0 : index
    %c0_15 = arith.constant 0 : index
    %35 = vector.load %arg4[%c0_14, %c0_15] : memref<32x16xbf16, #tpu.memory_space<vmem>>, vector<32x16xbf16>
    %36 = arith.truncf %34 : vector<16x256xf32> to vector<16x256xbf16>
    %cst_16 = arith.constant dense<0.000000e+00> : vector<32x256xf32>
    %37 = tpu.matmul %35, %36, %cst_16 {dimension_numbers = #tpu.dot_dimension_numbers<[1], [0], [0], [1], [0, 0, 1, 1], [], []>} : vector<32x16xbf16>, vector<16x256xbf16>, vector<32x256xf32> -> vector<32x256xf32>
    %c0_17 = arith.constant 0 : index
    %c0_18 = arith.constant 0 : index
    %38 = vector.load %arg5[%c0_17, %c0_18] : memref<32x1xf32, #tpu.memory_space<vmem>>, vector<32x1xf32>
    %39 = vector.broadcast %38 : vector<32x1xf32> to vector<32x256xf32>
    %40 = arith.addf %37, %39 : vector<32x256xf32>
    %cst_19 = arith.constant 0.000000e+00 : f32
    %41 = vector.broadcast %cst_19 : f32 to vector<32x256xf32>
    %42 = arith.maximumf %40, %41 : vector<32x256xf32>
    %c1_i32_20 = arith.constant 1 : i32
    %43 = tpu.dynamic_rotate %42 by %c1_i32_20 dim 1 : vector<32x256xf32>, i32 -> vector<32x256xf32>
    %cst_21 = arith.constant 0.000000e+00 : f32
    %44 = vector.shape_cast %18 : vector<1x256xi1> to vector<1x256xi1>
    %45 = vector.broadcast %44 : vector<1x256xi1> to vector<32x256xi1>
    %46 = vector.broadcast %cst_21 : f32 to vector<32x256xf32>
    %47 = arith.select %45, %46, %43 : vector<32x256xi1>, vector<32x256xf32>
    %c255_i32 = arith.constant 255 : i32
    %48 = tpu.dynamic_rotate %42 by %c255_i32 dim 1 : vector<32x256xf32>, i32 -> vector<32x256xf32>
    %cst_22 = arith.constant 0.000000e+00 : f32
    %49 = vector.shape_cast %20 : vector<1x256xi1> to vector<1x256xi1>
    %50 = vector.broadcast %49 : vector<1x256xi1> to vector<32x256xi1>
    %51 = vector.broadcast %cst_22 : f32 to vector<32x256xf32>
    %52 = arith.select %50, %51, %48 : vector<32x256xi1>, vector<32x256xf32>
    %53 = tpu.concatenate %47, %42, %52 in 0 : vector<32x256xf32>, vector<32x256xf32>, vector<32x256xf32> -> vector<96x256xf32>
    %54 = arith.truncf %53 : vector<96x256xf32> to vector<96x256xbf16>
    %c0_23 = arith.constant 0 : index
    %c0_24 = arith.constant 0 : index
    %55 = vector.load %arg6[%c0_23, %c0_24] : memref<24x96xbf16, #tpu.memory_space<vmem>>, vector<24x96xbf16>
    %cst_25 = arith.constant dense<0.000000e+00> : vector<24x256xf32>
    %56 = tpu.matmul %55, %54, %cst_25 {dimension_numbers = #tpu.dot_dimension_numbers<[1], [0], [0], [1], [0, 0, 1, 1], [], []>} : vector<24x96xbf16>, vector<96x256xbf16>, vector<24x256xf32> -> vector<24x256xf32>
    %57 = vector.extract_strided_slice %56 {offsets = [0, 0], sizes = [8, 256], strides = [1, 1]} : vector<24x256xf32> to vector<8x256xf32>
    %58 = vector.extract_strided_slice %56 {offsets = [8, 0], sizes = [8, 256], strides = [1, 1]} : vector<24x256xf32> to vector<8x256xf32>
    %59 = vector.extract_strided_slice %56 {offsets = [16, 0], sizes = [8, 256], strides = [1, 1]} : vector<24x256xf32> to vector<8x256xf32>
    %60 = vector.extract_strided_slice %57 {offsets = [0, 0], sizes = [8, 240], strides = [1, 1]} : vector<8x256xf32> to vector<8x240xf32>
    %61 = tpu.concatenate %21, %60 in 1 : vector<8x16xf32>, vector<8x240xf32> -> vector<8x256xf32>
    %62 = arith.addf %58, %61 : vector<8x256xf32>
    %63 = vector.extract_strided_slice %59 {offsets = [0, 16], sizes = [8, 240], strides = [1, 1]} : vector<8x256xf32> to vector<8x240xf32>
    %64 = tpu.concatenate %63, %21 in 1 : vector<8x240xf32>, vector<8x16xf32> -> vector<8x256xf32>
    %65 = arith.addf %62, %64 : vector<8x256xf32>
    %c0_26 = arith.constant 0 : index
    %c16 = arith.constant 16 : index
    %c0_27 = arith.constant 0 : index
    %66 = vector.load %arg7[%c0_26, %c16, %c0_27] : memref<2x24x256xf32, #tpu.memory_space<vmem>>, vector<1x8x256xf32>
    %67 = vector.shape_cast %66 : vector<1x8x256xf32> to vector<8x256xf32>
    %68 = vector.shape_cast %65 : vector<8x256xf32> to vector<1x8x256xf32>
    tpu.vector_store %arg7[%c0_26, %c16, %c0_27], %68 {strides = array<i32>} : memref<2x24x256xf32, #tpu.memory_space<vmem>>, vector<1x8x256xf32>,
    %c1 = arith.constant 1 : index
    %c0_28 = arith.constant 0 : index
    %c0_29 = arith.constant 0 : index
    %69 = vector.load %arg1[%c1, %c0_28, %c0_29] : memref<2x16x256xf32, #tpu.memory_space<vmem>>, vector<1x16x256xf32>
    %70 = vector.shape_cast %69 : vector<1x16x256xf32> to vector<16x256xf32>
    %c1_30 = arith.constant 1 : index
    %c0_31 = arith.constant 0 : index
    %c0_32 = arith.constant 0 : index
    %71 = vector.load %arg7[%c1_30, %c0_31, %c0_32] : memref<2x24x256xf32, #tpu.memory_space<vmem>>, vector<1x16x256xf32>
    %72 = vector.shape_cast %71 : vector<1x16x256xf32> to vector<16x256xf32>
    %73 = vector.shape_cast %70 : vector<16x256xf32> to vector<1x16x256xf32>
    tpu.vector_store %arg7[%c1_30, %c0_31, %c0_32], %73 {strides = array<i32>} : memref<2x24x256xf32, #tpu.memory_space<vmem>>, vector<1x16x256xf32>,
    %c0_33 = arith.constant 0 : index
    %c0_34 = arith.constant 0 : index
    %74 = vector.load %arg2[%c0_33, %c0_34] : memref<16x1xf32, #tpu.memory_space<vmem>>, vector<16x1xf32>
    %75 = vector.broadcast %74 : vector<16x1xf32> to vector<16x256xf32>
    %76 = arith.mulf %70, %75 : vector<16x256xf32>
    %c0_35 = arith.constant 0 : index
    %c0_36 = arith.constant 0 : index
    %77 = vector.load %arg3[%c0_35, %c0_36] : memref<16x1xf32, #tpu.memory_space<vmem>>, vector<16x1xf32>
    %78 = vector.broadcast %77 : vector<16x1xf32> to vector<16x256xf32>
    %79 = arith.addf %76, %78 : vector<16x256xf32>
    %cst_37 = arith.constant 0.000000e+00 : f32
    %80 = vector.broadcast %cst_37 : f32 to vector<16x256xf32>
    %81 = arith.maximumf %79, %80 : vector<16x256xf32>
    %c0_38 = arith.constant 0 : index
    %c0_39 = arith.constant 0 : index
    %82 = vector.load %arg4[%c0_38, %c0_39] : memref<32x16xbf16, #tpu.memory_space<vmem>>, vector<32x16xbf16>
    %83 = arith.truncf %81 : vector<16x256xf32> to vector<16x256xbf16>
    %cst_40 = arith.constant dense<0.000000e+00> : vector<32x256xf32>
    %84 = tpu.matmul %82, %83, %cst_40 {dimension_numbers = #tpu.dot_dimension_numbers<[1], [0], [0], [1], [0, 0, 1, 1], [], []>} : vector<32x16xbf16>, vector<16x256xbf16>, vector<32x256xf32> -> vector<32x256xf32>
    %c0_41 = arith.constant 0 : index
    %c0_42 = arith.constant 0 : index
    %85 = vector.load %arg5[%c0_41, %c0_42] : memref<32x1xf32, #tpu.memory_space<vmem>>, vector<32x1xf32>
    %86 = vector.broadcast %85 : vector<32x1xf32> to vector<32x256xf32>
    %87 = arith.addf %84, %86 : vector<32x256xf32>
    %cst_43 = arith.constant 0.000000e+00 : f32
    %88 = vector.broadcast %cst_43 : f32 to vector<32x256xf32>
    %89 = arith.maximumf %87, %88 : vector<32x256xf32>
    %c1_i32_44 = arith.constant 1 : i32
    %90 = tpu.dynamic_rotate %89 by %c1_i32_44 dim 1 : vector<32x256xf32>, i32 -> vector<32x256xf32>
    %cst_45 = arith.constant 0.000000e+00 : f32
    %91 = vector.shape_cast %18 : vector<1x256xi1> to vector<1x256xi1>
    %92 = vector.broadcast %91 : vector<1x256xi1> to vector<32x256xi1>
    %93 = vector.broadcast %cst_45 : f32 to vector<32x256xf32>
    %94 = arith.select %92, %93, %90 : vector<32x256xi1>, vector<32x256xf32>
    %c255_i32_46 = arith.constant 255 : i32
    %95 = tpu.dynamic_rotate %89 by %c255_i32_46 dim 1 : vector<32x256xf32>, i32 -> vector<32x256xf32>
    %cst_47 = arith.constant 0.000000e+00 : f32
    %96 = vector.shape_cast %20 : vector<1x256xi1> to vector<1x256xi1>
    %97 = vector.broadcast %96 : vector<1x256xi1> to vector<32x256xi1>
    %98 = vector.broadcast %cst_47 : f32 to vector<32x256xf32>
    %99 = arith.select %97, %98, %95 : vector<32x256xi1>, vector<32x256xf32>
    %100 = tpu.concatenate %94, %89, %99 in 0 : vector<32x256xf32>, vector<32x256xf32>, vector<32x256xf32> -> vector<96x256xf32>
    %101 = arith.truncf %100 : vector<96x256xf32> to vector<96x256xbf16>
    %c0_48 = arith.constant 0 : index
    %c0_49 = arith.constant 0 : index
    %102 = vector.load %arg6[%c0_48, %c0_49] : memref<24x96xbf16, #tpu.memory_space<vmem>>, vector<24x96xbf16>
    %cst_50 = arith.constant dense<0.000000e+00> : vector<24x256xf32>
    %103 = tpu.matmul %102, %101, %cst_50 {dimension_numbers = #tpu.dot_dimension_numbers<[1], [0], [0], [1], [0, 0, 1, 1], [], []>} : vector<24x96xbf16>, vector<96x256xbf16>, vector<24x256xf32> -> vector<24x256xf32>
    %104 = vector.extract_strided_slice %103 {offsets = [0, 0], sizes = [8, 256], strides = [1, 1]} : vector<24x256xf32> to vector<8x256xf32>
    %105 = vector.extract_strided_slice %103 {offsets = [8, 0], sizes = [8, 256], strides = [1, 1]} : vector<24x256xf32> to vector<8x256xf32>
    %106 = vector.extract_strided_slice %103 {offsets = [16, 0], sizes = [8, 256], strides = [1, 1]} : vector<24x256xf32> to vector<8x256xf32>
    %107 = vector.extract_strided_slice %104 {offsets = [0, 0], sizes = [8, 240], strides = [1, 1]} : vector<8x256xf32> to vector<8x240xf32>
    %108 = tpu.concatenate %21, %107 in 1 : vector<8x16xf32>, vector<8x240xf32> -> vector<8x256xf32>
    %109 = arith.addf %105, %108 : vector<8x256xf32>
    %110 = vector.extract_strided_slice %106 {offsets = [0, 16], sizes = [8, 240], strides = [1, 1]} : vector<8x256xf32> to vector<8x240xf32>
    %111 = tpu.concatenate %110, %21 in 1 : vector<8x240xf32>, vector<8x16xf32> -> vector<8x256xf32>
    %112 = arith.addf %109, %111 : vector<8x256xf32>
    %c1_51 = arith.constant 1 : index
    %c16_52 = arith.constant 16 : index
    %c0_53 = arith.constant 0 : index
    %113 = vector.load %arg7[%c1_51, %c16_52, %c0_53] : memref<2x24x256xf32, #tpu.memory_space<vmem>>, vector<1x8x256xf32>
    %114 = vector.shape_cast %113 : vector<1x8x256xf32> to vector<8x256xf32>
    %115 = vector.shape_cast %112 : vector<8x256xf32> to vector<1x8x256xf32>
    tpu.vector_store %arg7[%c1_51, %c16_52, %c0_53], %115 {strides = array<i32>} : memref<2x24x256xf32, #tpu.memory_space<vmem>>, vector<1x8x256xf32>,
    return
  }
  func.func @transform_0(%arg0: i32) -> (i32, i32, i32) {
    %c0_i32 = arith.constant 0 : i32
    %c0_i32_0 = arith.constant 0 : i32
    %c0_i32_1 = arith.constant 0 : i32
    return %arg0, %c0_i32, %c0_i32_0 : i32, i32, i32
  }
  func.func @transform_1(%arg0: i32) -> (i32, i32) {
    %c0_i32 = arith.constant 0 : i32
    %c0_i32_0 = arith.constant 0 : i32
    %c0_i32_1 = arith.constant 0 : i32
    return %c0_i32, %c0_i32_0 : i32, i32
  }
  func.func @transform_2(%arg0: i32) -> (i32, i32) {
    %c0_i32 = arith.constant 0 : i32
    %c0_i32_0 = arith.constant 0 : i32
    %c0_i32_1 = arith.constant 0 : i32
    return %c0_i32, %c0_i32_0 : i32, i32
  }
  func.func @transform_3(%arg0: i32) -> (i32, i32) {
    %c0_i32 = arith.constant 0 : i32
    %c0_i32_0 = arith.constant 0 : i32
    %c0_i32_1 = arith.constant 0 : i32
    return %c0_i32, %c0_i32_0 : i32, i32
  }
  func.func @transform_4(%arg0: i32) -> (i32, i32) {
    %c0_i32 = arith.constant 0 : i32
    %c0_i32_0 = arith.constant 0 : i32
    %c0_i32_1 = arith.constant 0 : i32
    return %c0_i32, %c0_i32_0 : i32, i32
  }
  func.func @transform_5(%arg0: i32) -> (i32, i32) {
    %c0_i32 = arith.constant 0 : i32
    %c0_i32_0 = arith.constant 0 : i32
    %c0_i32_1 = arith.constant 0 : i32
    return %c0_i32, %c0_i32_0 : i32, i32
  }
  func.func @transform_6(%arg0: i32) -> (i32, i32, i32) {
    %c0_i32 = arith.constant 0 : i32
    %c0_i32_0 = arith.constant 0 : i32
    %c0_i32_1 = arith.constant 0 : i32
    return %arg0, %c0_i32, %c0_i32_0 : i32, i32, i32
  }
}

</mosaic_0001>

<llo_original>
// kernel: tpu_custom_call.1
$region0: #{tpu_custom_call.1}
  #allocation0 [shape = 'u32[]', space=smem, size = 0x4, offset = 0x4, fixed_abs, tag = 'smem constant byte address 0x4 - core index']
  #allocation1 [shape = 'u32[72,128]{1,0:T(1,128)}', space=vmem, size = 0x9000, scoped, tag = 'internal scratch']
  %s0 = inlined_call_operand.hbm [shape: f32[4,16,256], index: 0, kind: input, shape index: {}]
  %s1 = inlined_call_operand.vmem [shape: f32[16,1], index: 1, kind: input, shape index: {}]
  %s2 = inlined_call_operand.vmem [shape: f32[16,1], index: 2, kind: input, shape index: {}]
  %s3 = inlined_call_operand.vmem [shape: bf16[32,16], index: 3, kind: input, shape index: {}]
  %s4 = inlined_call_operand.vmem [shape: f32[32,1], index: 4, kind: input, shape index: {}]
  %s5 = inlined_call_operand.vmem [shape: bf16[24,96], index: 5, kind: input, shape index: {}]
  %s6 = inlined_call_operand.hbm [shape: f32[4,24,256], index: 6, kind: output, shape index: {}]
  %s7 = sld [smem:[#allocation0]]
  $region61: #{tpu_custom_call.1} parent=0
    _
  %s9 = ssub.s32 1, %s7
  %s10 = scalar_select 0, %s9, %s7
  $region1: #{tpu_custom_call.1} parent=0
    #allocation2 [shape = 'u8[65536]{0}', space=vmem, size = 0x10000, scoped, tag = 'input window, operand 0']
    #allocation3 [shape = 's32[2]{0}', space=sflag, size = 0x8, scoped, tag = 'scoped memory for tpu_custom_call.1']
    #allocation4 [shape = 's32[2]{0}', space=sflag, size = 0x8, scoped, tag = 'scoped memory for tpu_custom_call.1']
    #allocation5 [shape = 'u8[98304]{0}', space=vmem, size = 0x18000, scoped, tag = 'output window, operand 0']
    %11 = vsyncpa [#allocation3], 0
    %s12 = scalar_lea.sflag [#allocation3], 1
    %13 = vsyncpa %s12, 0
    %14 = vsyncpa [#allocation4], 0
    %s15 = scalar_lea.sflag [#allocation4], 1
    %16 = vsyncpa %s15, 0
    loop: start=0, step=1, limit=4
    $region2: #{tpu_custom_call.1} parent=1 // loop_pre_header
      _
    $region3: #{tpu_custom_call.1} parent=1 // loop_header
      %s18 = sphi 0, %s22
      %p19 = scmp.ge.s32.totalorder %s18, 4
      %s28 = sphi 0, %s30
      %s31 = sphi 0, %s28
      %s32 = sphi 0, %s31
      %s48 = sphi 0, %s32
      %s52 = sphi 0, %s52
      %s54 = sphi 0, %s52
      %s55 = sphi 0, %s54
      %s69 = sphi 0, %s55
      %s73 = sphi 0, %s73
      %s75 = sphi 0, %s73
      %s76 = sphi 0, %s75
      %s90 = sphi 0, %s76
      %s94 = sphi 0, %s94
      %s96 = sphi 0, %s94
      %s97 = sphi 0, %s96
      %s111 = sphi 0, %s97
      %s115 = sphi 0, %s115
      %s117 = sphi 0, %s115
      %s118 = sphi 0, %s117
      %s132 = sphi 0, %s118
      %s136 = sphi 0, %s136
      %s138 = sphi 0, %s136
      %s139 = sphi 0, %s138
      %s153 = sphi 0, %s139
      %s159 = sphi 0, %s161
      %s162 = sphi 0, %s159
      %s163 = sphi 0, %s162
      %s179 = sphi 0, %s163
    $region4: #{tpu_custom_call.1} parent=1 // loop_header_branch
      %21 = sbr.rel (%p19) target = $region8
    $region5: #{tpu_custom_call.1} parent=1 // loop_body
      %s23 = ssub.s32 %s18, 1
      %s24 = ssub.s32 %s18, 2
      %s25 = sadd.s32 %s18, 1
      %s26 = ssub.s32 %s18, %s25
      %p27 = scmp.eq.s32.totalorder %s26, 0
      %s29 = sadd.s32 %s28, 1
      %s30 = scalar_select %p27, %s28, %s29
      %p33 = pneg %p27
      %p34 = scmp.eq.s32.totalorder %s18, 1
      %p35 = por %p33, %p34
      %p36 = scmp.ne.s32.totalorder %s28, %s31
      %p37 = scmp.eq.s32.totalorder %s18, 0
      %p38 = por %p36, %p37
      %p39 = scmp.ne.s32.totalorder %s28, %s31
      %p40 = scmp.eq.s32.totalorder %s23, 1
      %p41 = por %p39, %p40
      %p42 = scmp.ne.s32.totalorder %s31, %s32
      %p43 = scmp.eq.s32.totalorder %s23, 0
      %p44 = por %p42, %p43
      %p45 = scmp.ne.s32.totalorder %s31, %s32
      %p46 = scmp.eq.s32.totalorder %s24, 1
      %p47 = por %p45, %p46
      %p49 = scmp.ne.s32.totalorder %s32, %s48
      %p50 = scmp.eq.s32.totalorder %s24, 0
      %p51 = por %p49, %p50
      %s53 = sadd.s32 %s52, 1
      %p56 = scmp.eq.s32.totalorder %s18, 1
      %p57 = scmp.ne.s32.totalorder %s52, %s54
      %p58 = scmp.eq.s32.totalorder %s18, 0
      %p59 = por %p57, %p58
      %p60 = scmp.ne.s32.totalorder %s52, %s54
      %p61 = scmp.eq.s32.totalorder %s23, 1
      %p62 = por %p60, %p61
      %p63 = scmp.ne.s32.totalorder %s54, %s55
      %p64 = scmp.eq.s32.totalorder %s23, 0
      %p65 = por %p63, %p64
      %p66 = scmp.ne.s32.totalorder %s54, %s55
      %p67 = scmp.eq.s32.totalorder %s24, 1
      %p68 = por %p66, %p67
      %p70 = scmp.ne.s32.totalorder %s55, %s69
      %p71 = scmp.eq.s32.totalorder %s24, 0
      %p72 = por %p70, %p71
      %s74 = sadd.s32 %s73, 1
      %p77 = scmp.eq.s32.totalorder %s18, 1
      %p78 = scmp.ne.s32.totalorder %s73, %s75
      %p79 = scmp.eq.s32.totalorder %s18, 0
      %p80 = por %p78, %p79
      %p81 = scmp.ne.s32.totalorder %s73, %s75
      %p82 = scmp.eq.s32.totalorder %s23, 1
      %p83 = por %p81, %p82
      %p84 = scmp.ne.s32.totalorder %s75, %s76
      %p85 = scmp.eq.s32.totalorder %s23, 0
      %p86 = por %p84, %p85
      %p87 = scmp.ne.s32.totalorder %s75, %s76
      %p88 = scmp.eq.s32.totalorder %s24, 1
      %p89 = por %p87, %p88
      %p91 = scmp.ne.s32.totalorder %s76, %s90
      %p92 = scmp.eq.s32.totalorder %s24, 0
      %p93 = por %p91, %p92
      %s95 = sadd.s32 %s94, 1
      %p98 = scmp.eq.s32.totalorder %s18, 1
      %p99 = scmp.ne.s32.totalorder %s94, %s96
      %p100 = scmp.eq.s32.totalorder %s18, 0
      %p101 = por %p99, %p100
      %p102 = scmp.ne.s32.totalorder %s94, %s96
      %p103 = scmp.eq.s32.totalorder %s23, 1
      %p104 = por %p102, %p103
      %p105 = scmp.ne.s32.totalorder %s96, %s97
      %p106 = scmp.eq.s32.totalorder %s23, 0
      %p107 = por %p105, %p106
      %p108 = scmp.ne.s32.totalorder %s96, %s97
      %p109 = scmp.eq.s32.totalorder %s24, 1
      %p110 = por %p108, %p109
      %p112 = scmp.ne.s32.totalorder %s97, %s111
      %p113 = scmp.eq.s32.totalorder %s24, 0
      %p114 = por %p112, %p113
      %s116 = sadd.s32 %s115, 1
      %p119 = scmp.eq.s32.totalorder %s18, 1
      %p120 = scmp.ne.s32.totalorder %s115, %s117
      %p121 = scmp.eq.s32.totalorder %s18, 0
      %p122 = por %p120, %p121
      %p123 = scmp.ne.s32.totalorder %s115, %s117
      %p124 = scmp.eq.s32.totalorder %s23, 1
      %p125 = por %p123, %p124
      %p126 = scmp.ne.s32.totalorder %s117, %s118
      %p127 = scmp.eq.s32.totalorder %s23, 0
      %p128 = por %p126, %p127
      %p129 = scmp.ne.s32.totalorder %s117, %s118
      %p130 = scmp.eq.s32.totalorder %s24, 1
      %p131 = por %p129, %p130
      %p133 = scmp.ne.s32.totalorder %s118, %s132
      %p134 = scmp.eq.s32.totalorder %s24, 0
      %p135 = por %p133, %p134
      %s137 = sadd.s32 %s136, 1
      %p140 = scmp.eq.s32.totalorder %s18, 1
      %p141 = scmp.ne.s32.totalorder %s136, %s138
      %p142 = scmp.eq.s32.totalorder %s18, 0
      %p143 = por %p141, %p142
      %p144 = scmp.ne.s32.totalorder %s136, %s138
      %p145 = scmp.eq.s32.totalorder %s23, 1
      %p146 = por %p144, %p145
      %p147 = scmp.ne.s32.totalorder %s138, %s139
      %p148 = scmp.eq.s32.totalorder %s23, 0
      %p149 = por %p147, %p148
      %p150 = scmp.ne.s32.totalorder %s138, %s139
      %p151 = scmp.eq.s32.totalorder %s24, 1
      %p152 = por %p150, %p151
      %p154 = scmp.ne.s32.totalorder %s139, %s153
      %p155 = scmp.eq.s32.totalorder %s24, 0
      %p156 = por %p154, %p155
      %s157 = ssub.s32 %s18, %s25
      %p158 = scmp.eq.s32.totalorder %s157, 0
      %s160 = sadd.s32 %s159, 1
      %s161 = scalar_select %p158, %s159, %s160
      %p164 = pneg %p158
      %p165 = scmp.eq.s32.totalorder %s18, 1
      %p166 = por %p164, %p165
      %p167 = scmp.ne.s32.totalorder %s159, %s162
      %p168 = scmp.eq.s32.totalorder %s18, 0
      %p169 = por %p167, %p168
      %p170 = scmp.ne.s32.totalorder %s159, %s162
      %p171 = scmp.eq.s32.totalorder %s23, 1
      %p172 = por %p170, %p171
      %p173 = scmp.ne.s32.totalorder %s162, %s163
      %p174 = scmp.eq.s32.totalorder %s23, 0
      %p175 = por %p173, %p174
      %p176 = scmp.ne.s32.totalorder %s162, %s163
      %p177 = scmp.eq.s32.totalorder %s24, 1
      %p178 = por %p176, %p177
      %p180 = scmp.ne.s32.totalorder %s163, %s179
      %p181 = scmp.eq.s32.totalorder %s24, 0
      %p182 = por %p180, %p181
      %p183 = scmp.le.s32.totalorder 1, %s18
      %p184 = scmp.lt.s32.totalorder %s18, 3
      %p185 = pnand %p183, %p184
      %p186 = pneg %p185
      // Predicated region
      $region9: #{tpu_custom_call.1} parent=5 // pred_check
        _
      $region10: #{tpu_custom_call.1} parent=5 // pred_check_branch
        %188 = sbr.rel (%p185) target = $region12
      $region11: #{tpu_custom_call.1} parent=5 // pred_region
        %s189 = ssub.s32 %s18, 1
        // Predicated region
        $region13: #{tpu_custom_call.1} parent=11 // pred_check
          %p190 = pneg %p65
        $region14: #{tpu_custom_call.1} parent=11 // pred_check_branch
          %192 = sbr.rel (%p190) target = $region16
        $region15: #{tpu_custom_call.1} parent=11 // pred_region
          _
        $region16: #{tpu_custom_call.1} parent=11 // pred_fallthru
          _
        // Predicated region
        $region17: #{tpu_custom_call.1} parent=11 // pred_check
          %p193 = pneg %p86
        $region18: #{tpu_custom_call.1} parent=11 // pred_check_branch
          %195 = sbr.rel (%p193) target = $region20
        $region19: #{tpu_custom_call.1} parent=11 // pred_region
          _
        $region20: #{tpu_custom_call.1} parent=11 // pred_fallthru
          _
        // Predicated region
        $region21: #{tpu_custom_call.1} parent=11 // pred_check
          %p196 = pneg %p107
        $region22: #{tpu_custom_call.1} parent=11 // pred_check_branch
          %198 = sbr.rel (%p196) target = $region24
        $region23: #{tpu_custom_call.1} parent=11 // pred_region
          _
        $region24: #{tpu_custom_call.1} parent=11 // pred_fallthru
          _
        // Predicated region
        $region25: #{tpu_custom_call.1} parent=11 // pred_check
          %p199 = pneg %p128
        $region26: #{tpu_custom_call.1} parent=11 // pred_check_branch
          %201 = sbr.rel (%p199) target = $region28
        $region27: #{tpu_custom_call.1} parent=11 // pred_region
          _
        $region28: #{tpu_custom_call.1} parent=11 // pred_fallthru
          _
        // Predicated region
        $region29: #{tpu_custom_call.1} parent=11 // pred_check
          %p202 = pneg %p149
        $region30: #{tpu_custom_call.1} parent=11 // pred_check_branch
          %204 = sbr.rel (%p202) target = $region32
        $region31: #{tpu_custom_call.1} parent=11 // pred_region
          _
        $region32: #{tpu_custom_call.1} parent=11 // pred_fallthru
          _
      $region12: #{tpu_custom_call.1} parent=5 // pred_fallthru
        _
      %p205 = scmp.lt.s32.totalorder %s18, 2
      // Predicated region
      $region33: #{tpu_custom_call.1} parent=5 // pred_check
        %p206 = pneg %p205
      $region34: #{tpu_custom_call.1} parent=5 // pred_check_branch
        %208 = sbr.rel (%p206) target = $region36
      $region35: #{tpu_custom_call.1} parent=5 // pred_region
        // Predicated region
        $region37: #{tpu_custom_call.1} parent=35 // pred_check
          %p209 = pneg %p38
        $region38: #{tpu_custom_call.1} parent=35 // pred_check_branch
          %211 = sbr.rel (%p209) target = $region40
        $region39: #{tpu_custom_call.1} parent=35 // pred_region
          %s212 = sand.u32 %s28, 1
          %s213 = scalar_lea.sflag [#allocation3], %s212
          %s214 = sand.u32 %s28, 1
          %s215 = smul.addr %s214, 64
          %s216 = scalar_lea.vmem [#allocation2], %s215
          %s217 = smul.u32 2, %s18
          %219 = vsyncadd %s213, 0
          %s220 = smul.addr %s217, 4
          %s221 = smul.addr %s220, 8
          %s222 = scalar_lea.hbm %s0, %s221
          %s223 = sshll.u32 %s222, 4
          %s224 = int_to_ptr.hbm [resolvable:$true] %s223
          %s225 = sshll.u32 %s216, 4
          %s226 = int_to_ptr.vmem [resolvable:$true] %s225
          %231 = dma.hbm_to_vmem [thread:$0]  %s224, 1024, %s226, %s213, 256, 256, 16
        $region40: #{tpu_custom_call.1} parent=35 // pred_fallthru
          _
      $region36: #{tpu_custom_call.1} parent=5 // pred_fallthru
        _
      %p232 = scmp.le.s32.totalorder 1, %s18
      %p233 = scmp.lt.s32.totalorder %s18, 3
      %p234 = pnand %p232, %p233
      %p235 = pneg %p234
      // Predicated region
      $region41: #{tpu_custom_call.1} parent=5 // pred_check
        _
      $region42: #{tpu_custom_call.1} parent=5 // pred_check_branch
        %237 = sbr.rel (%p234) target = $region44
      $region43: #{tpu_custom_call.1} parent=5 // pred_region
        %s238 = ssub.s32 %s18, 1
        %s239 = sand.u32 %s31, 1
        %s240 = scalar_lea.sflag [#allocation3], %s239
        %s241 = sand.u32 %s31, 1
        %s242 = smul.addr %s241, 64
        %s243 = scalar_lea.vmem [#allocation2], %s242
        // Predicated region
        $region45: #{tpu_custom_call.1} parent=43 // pred_check
          %p244 = pneg %p44
        $region46: #{tpu_custom_call.1} parent=43 // pred_check_branch
          %246 = sbr.rel (%p244) target = $region48
        $region47: #{tpu_custom_call.1} parent=43 // pred_region
          %248 = dma.done %s240, 1024
        $region48: #{tpu_custom_call.1} parent=43 // pred_fallthru
          _
        %s249 = sand.u32 %s31, 1
        %s250 = scalar_lea.sflag [#allocation3], %s249
        %s251 = sand.u32 %s31, 1
        %s252 = smul.addr %s251, 64
        %s253 = scalar_lea.vmem [#allocation2], %s252
        %p254 = pneg %p44
        %p255 = pneg %p41
        %p256 = pneg %p65
        %p257 = pneg %p62
        %p258 = pneg %p86
        %p259 = pneg %p83
        %p260 = pneg %p107
        %p261 = pneg %p104
        %p262 = pneg %p128
        %p263 = pneg %p125
        %p264 = pneg %p149
        %p265 = pneg %p146
        %p266 = pneg %p175
        %p267 = pneg %p172
        %s268 = sand.u32 %s162, 1
        %s269 = scalar_lea.sflag [#allocation4], %s268
        %s270 = sand.u32 %s162, 1
        %s271 = smul.addr %s270, 96
        %s272 = scalar_lea.vmem [#allocation5], %s271
        %s273 = smul.u32 2, %s23
        %s274 = smul.u32 2, %s23
        %v276 = vlaneseq
        %v277 = vand.u32 %v276, 127
        %v278 = vadd.s32 %v277, 128
        %vm279 = vcmp.lt.s32.totalorder %v277, 0
        %v280 = vsub.s32 0, %v277
        %v281 = vsel %vm279, %v280, %v277
        %v282 = vshrl.u32 %v281, 4
        %v283 = vand.u32 %v281, 15
        %v284 = vsub.s32 0, %v283
        %v285 = vsel %vm279, %v284, %v283
        %vm286 = vcmp.lt.s32.totalorder %v278, 0
        %v287 = vsub.s32 0, %v278
        %v288 = vsel %vm286, %v287, %v278
        %v289 = vshrl.u32 %v288, 4
        %v290 = vand.u32 %v288, 15
        %v291 = vsub.s32 0, %v290
        %v292 = vsel %vm286, %v291, %v290
        %vm293 = vcmp.ne.s32.totalorder %v285, 0
        %vm294 = vcmp.ne.s32.totalorder %v292, 0
        %vm295 = vcmp.lt.s32.totalorder %v285, 0
        %vm296 = vcmp.lt.s32.totalorder %v292, 0
        %vm297 = vmand %vm295, %vm293
        %vm298 = vmand %vm296, %vm294
        %v299 = vadd.s32 %v285, 16
        %v300 = vadd.s32 %v292, 16
        %v301 = vsel %vm297, %v299, %v285
        %v302 = vsel %vm298, %v300, %v292
        %vm303 = vcmp.eq.s32.totalorder %v301, 0
        %vm304 = vcmp.eq.s32.totalorder %v302, 0
        %vm305 = vcmp.eq.s32.totalorder %v301, 15
        %vm306 = vcmp.eq.s32.totalorder %v302, 15
        %v307 = vld [vmem:[%s243] sm:$0xff]
        %v308 = vld [vmem:[%s243 + $0x8] sm:$0xff]
        %v309 = vld [vmem:[%s243 + $0x10] sm:$0xff]
        %v310 = vld [vmem:[%s243 + $0x18] sm:$0xff]
        %311 = vst [vmem:[%s272] sm:$0xff] %v307
        %312 = vst [vmem:[%s272 + $0x8] sm:$0xff] %v308
        %313 = vst [vmem:[%s272 + $0x10] sm:$0xff] %v309
        %314 = vst [vmem:[%s272 + $0x18] sm:$0xff] %v310
        %v315 = vld [vmem:[%s1] sm:$0xff]
        %v316 = vld [vmem:[%s1 + $0x8] sm:$0xff]
        %318 = vset.pattern.permute.xlu0 0
        %319 = vperm.xlu0 %318, %v315
        %v320 = vpop.permute.xlu0 %319
        %323 = vset.pattern.permute.xlu0 0
        %324 = vperm.xlu0 %323, %v316
        %v325 = vpop.permute.xlu0 %324
        %v327 = vmul.f32 %v307, %v320
        %v328 = vmul.f32 %v308, %v320
        %v329 = vmul.f32 %v309, %v325
        %v330 = vmul.f32 %v310, %v325
        %v331 = vld [vmem:[%s2] sm:$0xff]
        %v332 = vld [vmem:[%s2 + $0x8] sm:$0xff]
        %334 = vset.pattern.permute.xlu0 0
        %335 = vperm.xlu0 %334, %v331
        %v336 = vpop.permute.xlu0 %335
        %339 = vset.pattern.permute.xlu0 0
        %340 = vperm.xlu0 %339, %v332
        %v341 = vpop.permute.xlu0 %340
        %v343 = vadd.f32 %v327, %v336
        %v344 = vadd.f32 %v328, %v336
        %v345 = vadd.f32 %v329, %v341
        %v346 = vadd.f32 %v330, %v341
        %v347 = vmax.f32 %v343, 0.0
        %v348 = vmax.f32 %v344, 0.0
        %v349 = vmax.f32 %v345, 0.0
        %v350 = vmax.f32 %v346, 0.0
        %v351 = vld [vmem:[%s3] sm:$0xf]
        %v352 = vld [vmem:[%s3 + $0x4] sm:$0xf]
        %v353 = vld [vmem:[%s3 + $0x8] sm:$0xf]
        %v354 = vld [vmem:[%s3 + $0xc] sm:$0xf]
        %v355 = vpack.c.bf16 %v349, %v347
        %v356 = vpack.c.bf16 %v350, %v348
        %v357 = vld [vmem:[%s4] sm:$0xff]
        %v358 = vld [vmem:[%s4 + $0x8] sm:$0xff]
        %v359 = vld [vmem:[%s4 + $0x10] sm:$0xff]
        %v360 = vld [vmem:[%s4 + $0x18] sm:$0xff]
        %362 = vset.pattern.permute.xlu0 0
        %363 = vperm.xlu0 %362, %v357
        %v364 = vpop.permute.xlu0 %363
        %367 = vset.pattern.permute.xlu0 0
        %368 = vperm.xlu0 %367, %v358
        %v369 = vpop.permute.xlu0 %368
        %372 = vset.pattern.permute.xlu0 0
        %373 = vperm.xlu0 %372, %v359
        %v374 = vpop.permute.xlu0 %373
        %377 = vset.pattern.permute.xlu0 0
        %378 = vperm.xlu0 %377, %v360
        %v379 = vpop.permute.xlu0 %378
        %v385 = vunpack.c.l.b16 %v351
        %v386 = vunpack.c.l.b16 %v352
        %v387 = vunpack.c.l.b16 %v353
        %v388 = vunpack.c.l.b16 %v354
        %v389 = vpack.c.b16 %v386, %v385
        %v390 = vpack.c.b16 %v388, %v387
        %vm391 = vcmask 130048
        %v393 = vsel %vm391, %v389, 0
        %v396 = vsel %vm391, %v390, 0
        %398 = vmatpush.bf16.msra.mxu0 0
        %399 = vmatpush.bf16.msra.mxu0 0
        %400 = vmatpush.bf16.msra.mxu0 0
        %401 = vmatpush.bf16.msra.mxu0 0
        %402 = vmatpush.bf16.msra.mxu0 0
        %403 = vmatpush.bf16.msra.mxu0 0
        %404 = vmatpush.bf16.msra.mxu0 0
        %405 = vmatpush.bf16.msra.mxu0 %v355
        %406 = vmatmul.bf16.gmra.mxu0 %v393
        %v407 = vpop.f32.mrf.mxu0
        %v408 = vadd.f32 %v364, %v407
        %v409 = vpop.f32.mrf.mxu0
        %v410 = vadd.f32 %v369, %v409
        %411 = vmatmul.bf16.gmra.mxu0 %v396
        %v412 = vpop.f32.mrf.mxu0
        %v413 = vadd.f32 %v374, %v412
        %v414 = vpop.f32.mrf.mxu0
        %v415 = vadd.f32 %v379, %v414
        %416 = vdwg.mxu0
        %417 = vmatpush.bf16.msra.mxu0 0
        %418 = vmatpush.bf16.msra.mxu0 0
        %419 = vmatpush.bf16.msra.mxu0 0
        %420 = vmatpush.bf16.msra.mxu0 0
        %421 = vmatpush.bf16.msra.mxu0 0
        %422 = vmatpush.bf16.msra.mxu0 0
        %423 = vmatpush.bf16.msra.mxu0 0
        %424 = vmatpush.bf16.msra.mxu0 %v356
        %425 = vmatmul.bf16.gmra.mxu0 %v393
        %v426 = vpop.f32.mrf.mxu0
        %v427 = vadd.f32 %v364, %v426
        %v428 = vpop.f32.mrf.mxu0
        %v429 = vadd.f32 %v369, %v428
        %430 = vmatmul.bf16.gmra.mxu0 %v396
        %v431 = vpop.f32.mrf.mxu0
        %v432 = vadd.f32 %v374, %v431
        %v433 = vpop.f32.mrf.mxu0
        %v434 = vadd.f32 %v379, %v433
        %435 = vdwg.mxu0
        %v436 = vmax.f32 %v408, 0.0
        %v437 = vmax.f32 %v427, 0.0
        %v438 = vmax.f32 %v410, 0.0
        %v439 = vmax.f32 %v429, 0.0
        %v440 = vmax.f32 %v413, 0.0
        %v441 = vmax.f32 %v432, 0.0
        %v442 = vmax.f32 %v415, 0.0
        %v443 = vmax.f32 %v434, 0.0
        %444 = vrot.lane.b32.xlu0 %v436, 1
        %v445 = vpop.permute.xlu0 %444
        %446 = vrot.lane.b32.xlu0 %v438, 1
        %v447 = vpop.permute.xlu0 %446
        %448 = vrot.lane.b32.xlu0 %v440, 1
        %v449 = vpop.permute.xlu0 %448
        %450 = vrot.lane.b32.xlu0 %v442, 1
        %v451 = vpop.permute.xlu0 %450
        %452 = vrot.lane.b32.xlu0 %v437, 1
        %v453 = vpop.permute.xlu0 %452
        %454 = vrot.lane.b32.xlu0 %v439, 1
        %v455 = vpop.permute.xlu0 %454
        %456 = vrot.lane.b32.xlu0 %v441, 1
        %v457 = vpop.permute.xlu0 %456
        %458 = vrot.lane.b32.xlu0 %v443, 1
        %v459 = vpop.permute.xlu0 %458
        %vm460 = vcmp.lt.s32.totalorder %v277, 1
        %v461 = vsel %vm460, %v445, %v453
        %v462 = vsel %vm460, %v447, %v455
        %v463 = vsel %vm460, %v449, %v457
        %v464 = vsel %vm460, %v451, %v459
        %v465 = vsel %vm460, %v453, %v445
        %v466 = vsel %vm460, %v455, %v447
        %v467 = vsel %vm460, %v457, %v449
        %v468 = vsel %vm460, %v459, %v451
        %v469 = vsel %vm303, 1, 0
        %v470 = vsel %vm304, 1, 0
        %vm471 = vcmp.eq.s32.totalorder %v469, 1
        %vm472 = vcmp.eq.s32.totalorder %v470, 1
        %v473 = vsel %vm471, 0.0, %v465
        %v474 = vsel %vm472, 0.0, %v461
        %v475 = vsel %vm471, 0.0, %v466
        %v476 = vsel %vm472, 0.0, %v462
        %v477 = vsel %vm471, 0.0, %v467
        %v478 = vsel %vm472, 0.0, %v463
        %v479 = vsel %vm471, 0.0, %v468
        %v480 = vsel %vm472, 0.0, %v464
        %481 = vrot.lane.b32.xlu0 %v436, 127
        %v482 = vpop.permute.xlu0 %481
        %483 = vrot.lane.b32.xlu0 %v438, 127
        %v484 = vpop.permute.xlu0 %483
        %485 = vrot.lane.b32.xlu0 %v440, 127
        %v486 = vpop.permute.xlu0 %485
        %487 = vrot.lane.b32.xlu0 %v442, 127
        %v488 = vpop.permute.xlu0 %487
        %489 = vrot.lane.b32.xlu0 %v437, 127
        %v490 = vpop.permute.xlu0 %489
        %491 = vrot.lane.b32.xlu0 %v439, 127
        %v492 = vpop.permute.xlu0 %491
        %493 = vrot.lane.b32.xlu0 %v441, 127
        %v494 = vpop.permute.xlu0 %493
        %495 = vrot.lane.b32.xlu0 %v443, 127
        %v496 = vpop.permute.xlu0 %495
        %vm497 = vcmp.lt.s32.totalorder %v277, 127
        %v498 = vsel %vm497, %v482, %v490
        %v499 = vsel %vm497, %v484, %v492
        %v500 = vsel %vm497, %v486, %v494
        %v501 = vsel %vm497, %v488, %v496
        %v502 = vsel %vm497, %v490, %v482
        %v503 = vsel %vm497, %v492, %v484
        %v504 = vsel %vm497, %v494, %v486
        %v505 = vsel %vm497, %v496, %v488
        %v506 = vsel %vm305, 1, 0
        %v507 = vsel %vm306, 1, 0
        %vm508 = vcmp.eq.s32.totalorder %v506, 1
        %vm509 = vcmp.eq.s32.totalorder %v507, 1
        %v510 = vsel %vm508, 0.0, %v498
        %v511 = vsel %vm509, 0.0, %v502
        %v512 = vsel %vm508, 0.0, %v499
        %v513 = vsel %vm509, 0.0, %v503
        %v514 = vsel %vm508, 0.0, %v500
        %v515 = vsel %vm509, 0.0, %v504
        %v516 = vsel %vm508, 0.0, %v501
        %v517 = vsel %vm509, 0.0, %v505
        %v518 = vpack.c.bf16 %v475, %v473
        %v519 = vpack.c.bf16 %v476, %v474
        %v520 = vpack.c.bf16 %v479, %v477
        %v521 = vpack.c.bf16 %v480, %v478
        %v522 = vpack.c.bf16 %v438, %v436
        %v523 = vpack.c.bf16 %v439, %v437
        %v524 = vpack.c.bf16 %v442, %v440
        %v525 = vpack.c.bf16 %v443, %v441
        %v526 = vpack.c.bf16 %v512, %v510
        %v527 = vpack.c.bf16 %v513, %v511
        %v528 = vpack.c.bf16 %v516, %v514
        %v529 = vpack.c.bf16 %v517, %v515
        %v530 = vld [vmem:[%s5] sm:$0xf]
        %v531 = vld [vmem:[%s5 + $0x4] sm:$0xf]
        %v532 = vld [vmem:[%s5 + $0x8] sm:$0xf]
        %v536 = vunpack.c.l.b16 %v530
        %v537 = vunpack.c.l.b16 %v531
        %v538 = vunpack.c.l.b16 %v532
        %v539 = vpack.c.b16 %v537, %v536
        %v540 = vpack.c.b16 %v538, %v538
        %vm541 = vcmask 785408
        %v543 = vsel %vm541, %v539, 0
        %v546 = vsel %vm541, %v540, 0
        %548 = vmatpush.bf16.msra.mxu0 0
        %549 = vmatpush.bf16.msra.mxu0 0
        %550 = vmatpush.bf16.msra.mxu0 %v528
        %551 = vmatpush.bf16.msra.mxu0 %v526
        %552 = vmatpush.bf16.msra.mxu0 %v524
        %553 = vmatpush.bf16.msra.mxu0 %v522
        %554 = vmatpush.bf16.msra.mxu0 %v520
        %555 = vmatpush.bf16.msra.mxu0 %v518
        %556 = vmatmul.bf16.gmra.mxu0 %v543
        %v557 = vpop.f32.mrf.mxu0
        %v558 = vadd.f32 0.0, %v557
        %v559 = vpop.f32.mrf.mxu0
        %v560 = vadd.f32 0.0, %v559
        %561 = vmatmul.bf16.gmra.mxu0 %v546
        %v562 = vpop.f32.mrf.mxu0
        %v563 = vadd.f32 0.0, %v562
        %v564 = vpop.f32.mrf.mxu0
        %565 = vdwg.mxu0
        %566 = vmatpush.bf16.msra.mxu0 0
        %567 = vmatpush.bf16.msra.mxu0 0
        %568 = vmatpush.bf16.msra.mxu0 %v529
        %569 = vmatpush.bf16.msra.mxu0 %v527
        %570 = vmatpush.bf16.msra.mxu0 %v525
        %571 = vmatpush.bf16.msra.mxu0 %v523
        %572 = vmatpush.bf16.msra.mxu0 %v521
        %573 = vmatpush.bf16.msra.mxu0 %v519
        %574 = vmatmul.bf16.gmra.mxu0 %v543
        %v575 = vpop.f32.mrf.mxu0
        %v576 = vadd.f32 0.0, %v575
        %v577 = vpop.f32.mrf.mxu0
        %v578 = vadd.f32 0.0, %v577
        %579 = vmatmul.bf16.gmra.mxu0 %v546
        %v580 = vpop.f32.mrf.mxu0
        %v581 = vadd.f32 0.0, %v580
        %v582 = vpop.f32.mrf.mxu0
        %583 = vdwg.mxu0
        %586 = vrot.lane.b32.xlu0 %v558, 16
        %v587 = vpop.permute.xlu0 %586
        %588 = vrot.lane.b32.xlu0 %v576, 16
        %v589 = vpop.permute.xlu0 %588
        %v590 = vsel %vm391, %v587, %v589
        %v593 = vsel %vm391, 0.0, %v587
        %v594 = vadd.f32 %v560, %v593
        %v595 = vadd.f32 %v578, %v590
        %598 = vrot.lane.b32.xlu0 %v563, 112
        %v599 = vpop.permute.xlu0 %598
        %600 = vrot.lane.b32.xlu0 %v581, 112
        %v601 = vpop.permute.xlu0 %600
        %vm602 = vcmask 916480
        %v603 = vsel %vm602, %v599, %v601
        %v606 = vsel %vm602, %v601, 0.0
        %v607 = vadd.f32 %v594, %v603
        %v608 = vadd.f32 %v595, %v606
        %609 = vst [vmem:[%s272 + $0x20] sm:$0xff] %v607
        %610 = vst [vmem:[%s272 + $0x28] sm:$0xff] %v608
        %s611 = scalar_lea.vmem %s243, 32 [#allocation2]
        %v612 = vld [vmem:[%s611] sm:$0xff]
        %v613 = vld [vmem:[%s611 + $0x8] sm:$0xff]
        %v614 = vld [vmem:[%s611 + $0x10] sm:$0xff]
        %v615 = vld [vmem:[%s611 + $0x18] sm:$0xff]
        %s616 = scalar_lea.vmem %s272, 48 [#allocation5]
        %617 = vst [vmem:[%s616] sm:$0xff] %v612
        %618 = vst [vmem:[%s616 + $0x8] sm:$0xff] %v613
        %619 = vst [vmem:[%s616 + $0x10] sm:$0xff] %v614
        %620 = vst [vmem:[%s616 + $0x18] sm:$0xff] %v615
        %v621 = vld [vmem:[%s1] sm:$0xff]
        %v622 = vld [vmem:[%s1 + $0x8] sm:$0xff]
        %624 = vset.pattern.permute.xlu0 0
        %625 = vperm.xlu0 %624, %v621
        %v626 = vpop.permute.xlu0 %625
        %629 = vset.pattern.permute.xlu0 0
        %630 = vperm.xlu0 %629, %v622
        %v631 = vpop.permute.xlu0 %630
        %v633 = vmul.f32 %v612, %v626
        %v634 = vmul.f32 %v613, %v626
        %v635 = vmul.f32 %v614, %v631
        %v636 = vmul.f32 %v615, %v631
        %v637 = vld [vmem:[%s2] sm:$0xff]
        %v638 = vld [vmem:[%s2 + $0x8] sm:$0xff]
        %640 = vset.pattern.permute.xlu0 0
        %641 = vperm.xlu0 %640, %v637
        %v642 = vpop.permute.xlu0 %641
        %645 = vset.pattern.permute.xlu0 0
        %646 = vperm.xlu0 %645, %v638
        %v647 = vpop.permute.xlu0 %646
        %v649 = vadd.f32 %v633, %v642
        %v650 = vadd.f32 %v634, %v642
        %v651 = vadd.f32 %v635, %v647
        %v652 = vadd.f32 %v636, %v647
        %v653 = vmax.f32 %v649, 0.0
        %v654 = vmax.f32 %v650, 0.0
        %v655 = vmax.f32 %v651, 0.0
        %v656 = vmax.f32 %v652, 0.0
        %v657 = vld [vmem:[%s3] sm:$0xf]
        %v658 = vld [vmem:[%s3 + $0x4] sm:$0xf]
        %v659 = vld [vmem:[%s3 + $0x8] sm:$0xf]
        %v660 = vld [vmem:[%s3 + $0xc] sm:$0xf]
        %v661 = vpack.c.bf16 %v655, %v653
        %v662 = vpack.c.bf16 %v656, %v654
        %v663 = vld [vmem:[%s4] sm:$0xff]
        %v664 = vld [vmem:[%s4 + $0x8] sm:$0xff]
        %v665 = vld [vmem:[%s4 + $0x10] sm:$0xff]
        %v666 = vld [vmem:[%s4 + $0x18] sm:$0xff]
        %668 = vset.pattern.permute.xlu0 0
        %669 = vperm.xlu0 %668, %v663
        %v670 = vpop.permute.xlu0 %669
        %673 = vset.pattern.permute.xlu0 0
        %674 = vperm.xlu0 %673, %v664
        %v675 = vpop.permute.xlu0 %674
        %678 = vset.pattern.permute.xlu0 0
        %679 = vperm.xlu0 %678, %v665
        %v680 = vpop.permute.xlu0 %679
        %683 = vset.pattern.permute.xlu0 0
        %684 = vperm.xlu0 %683, %v666
        %v685 = vpop.permute.xlu0 %684
        %v691 = vunpack.c.l.b16 %v657
        %v692 = vunpack.c.l.b16 %v658
        %v693 = vunpack.c.l.b16 %v659
        %v694 = vunpack.c.l.b16 %v660
        %v695 = vpack.c.b16 %v692, %v691
        %v696 = vpack.c.b16 %v694, %v693
        %v698 = vsel %vm391, %v695, 0
        %v701 = vsel %vm391, %v696, 0
        %703 = vmatpush.bf16.msra.mxu0 0
        %704 = vmatpush.bf16.msra.mxu0 0
        %705 = vmatpush.bf16.msra.mxu0 0
        %706 = vmatpush.bf16.msra.mxu0 0
        %707 = vmatpush.bf16.msra.mxu0 0
        %708 = vmatpush.bf16.msra.mxu0 0
        %709 = vmatpush.bf16.msra.mxu0 0
        %710 = vmatpush.bf16.msra.mxu0 %v661
        %711 = vmatmul.bf16.gmra.mxu0 %v698
        %v712 = vpop.f32.mrf.mxu0
        %v713 = vadd.f32 %v670, %v712
        %v714 = vpop.f32.mrf.mxu0
        %v715 = vadd.f32 %v675, %v714
        %716 = vmatmul.bf16.gmra.mxu0 %v701
        %v717 = vpop.f32.mrf.mxu0
        %v718 = vadd.f32 %v680, %v717
        %v719 = vpop.f32.mrf.mxu0
        %v720 = vadd.f32 %v685, %v719
        %721 = vdwg.mxu0
        %722 = vmatpush.bf16.msra.mxu0 0
        %723 = vmatpush.bf16.msra.mxu0 0
        %724 = vmatpush.bf16.msra.mxu0 0
        %725 = vmatpush.bf16.msra.mxu0 0
        %726 = vmatpush.bf16.msra.mxu0 0
        %727 = vmatpush.bf16.msra.mxu0 0
        %728 = vmatpush.bf16.msra.mxu0 0
        %729 = vmatpush.bf16.msra.mxu0 %v662
        %730 = vmatmul.bf16.gmra.mxu0 %v698
        %v731 = vpop.f32.mrf.mxu0
        %v732 = vadd.f32 %v670, %v731
        %v733 = vpop.f32.mrf.mxu0
        %v734 = vadd.f32 %v675, %v733
        %735 = vmatmul.bf16.gmra.mxu0 %v701
        %v736 = vpop.f32.mrf.mxu0
        %v737 = vadd.f32 %v680, %v736
        %v738 = vpop.f32.mrf.mxu0
        %v739 = vadd.f32 %v685, %v738
        %740 = vdwg.mxu0
        %v741 = vmax.f32 %v713, 0.0
        %v742 = vmax.f32 %v732, 0.0
        %v743 = vmax.f32 %v715, 0.0
        %v744 = vmax.f32 %v734, 0.0
        %v745 = vmax.f32 %v718, 0.0
        %v746 = vmax.f32 %v737, 0.0
        %v747 = vmax.f32 %v720, 0.0
        %v748 = vmax.f32 %v739, 0.0
        %749 = vrot.lane.b32.xlu0 %v741, 1
        %v750 = vpop.permute.xlu0 %749
        %751 = vrot.lane.b32.xlu0 %v743, 1
        %v752 = vpop.permute.xlu0 %751
        %753 = vrot.lane.b32.xlu0 %v745, 1
        %v754 = vpop.permute.xlu0 %753
        %755 = vrot.lane.b32.xlu0 %v747, 1
        %v756 = vpop.permute.xlu0 %755
        %757 = vrot.lane.b32.xlu0 %v742, 1
        %v758 = vpop.permute.xlu0 %757
        %759 = vrot.lane.b32.xlu0 %v744, 1
        %v760 = vpop.permute.xlu0 %759
        %761 = vrot.lane.b32.xlu0 %v746, 1
        %v762 = vpop.permute.xlu0 %761
        %763 = vrot.lane.b32.xlu0 %v748, 1
        %v764 = vpop.permute.xlu0 %763
        %v765 = vsel %vm460, %v750, %v758
        %v766 = vsel %vm460, %v752, %v760
        %v767 = vsel %vm460, %v754, %v762
        %v768 = vsel %vm460, %v756, %v764
        %v769 = vsel %vm460, %v758, %v750
        %v770 = vsel %vm460, %v760, %v752
        %v771 = vsel %vm460, %v762, %v754
        %v772 = vsel %vm460, %v764, %v756
        %v773 = vsel %vm471, 0.0, %v769
        %v774 = vsel %vm472, 0.0, %v765
        %v775 = vsel %vm471, 0.0, %v770
        %v776 = vsel %vm472, 0.0, %v766
        %v777 = vsel %vm471, 0.0, %v771
        %v778 = vsel %vm472, 0.0, %v767
        %v779 = vsel %vm471, 0.0, %v772
        %v780 = vsel %vm472, 0.0, %v768
        %781 = vrot.lane.b32.xlu0 %v741, 127
        %v782 = vpop.permute.xlu0 %781
        %783 = vrot.lane.b32.xlu0 %v743, 127
        %v784 = vpop.permute.xlu0 %783
        %785 = vrot.lane.b32.xlu0 %v745, 127
        %v786 = vpop.permute.xlu0 %785
        %787 = vrot.lane.b32.xlu0 %v747, 127
        %v788 = vpop.permute.xlu0 %787
        %789 = vrot.lane.b32.xlu0 %v742, 127
        %v790 = vpop.permute.xlu0 %789
        %791 = vrot.lane.b32.xlu0 %v744, 127
        %v792 = vpop.permute.xlu0 %791
        %793 = vrot.lane.b32.xlu0 %v746, 127
        %v794 = vpop.permute.xlu0 %793
        %795 = vrot.lane.b32.xlu0 %v748, 127
        %v796 = vpop.permute.xlu0 %795
        %v797 = vsel %vm497, %v782, %v790
        %v798 = vsel %vm497, %v784, %v792
        %v799 = vsel %vm497, %v786, %v794
        %v800 = vsel %vm497, %v788, %v796
        %v801 = vsel %vm497, %v790, %v782
        %v802 = vsel %vm497, %v792, %v784
        %v803 = vsel %vm497, %v794, %v786
        %v804 = vsel %vm497, %v796, %v788
        %v805 = vsel %vm508, 0.0, %v797
        %v806 = vsel %vm509, 0.0, %v801
        %v807 = vsel %vm508, 0.0, %v798
        %v808 = vsel %vm509, 0.0, %v802
        %v809 = vsel %vm508, 0.0, %v799
        %v810 = vsel %vm509, 0.0, %v803
        %v811 = vsel %vm508, 0.0, %v800
        %v812 = vsel %vm509, 0.0, %v804
        %v813 = vpack.c.bf16 %v775, %v773
        %v814 = vpack.c.bf16 %v776, %v774
        %v815 = vpack.c.bf16 %v779, %v777
        %v816 = vpack.c.bf16 %v780, %v778
        %v817 = vpack.c.bf16 %v743, %v741
        %v818 = vpack.c.bf16 %v744, %v742
        %v819 = vpack.c.bf16 %v747, %v745
        %v820 = vpack.c.bf16 %v748, %v746
        %v821 = vpack.c.bf16 %v807, %v805
        %v822 = vpack.c.bf16 %v808, %v806
        %v823 = vpack.c.bf16 %v811, %v809
        %v824 = vpack.c.bf16 %v812, %v810
        %v825 = vld [vmem:[%s5] sm:$0xf]
        %v826 = vld [vmem:[%s5 + $0x4] sm:$0xf]
        %v827 = vld [vmem:[%s5 + $0x8] sm:$0xf]
        %v831 = vunpack.c.l.b16 %v825
        %v832 = vunpack.c.l.b16 %v826
        %v833 = vunpack.c.l.b16 %v827
        %v834 = vpack.c.b16 %v832, %v831
        %v835 = vpack.c.b16 %v833, %v833
        %v837 = vsel %vm541, %v834, 0
        %v840 = vsel %vm541, %v835, 0
        %842 = vmatpush.bf16.msra.mxu0 0
        %843 = vmatpush.bf16.msra.mxu0 0
        %844 = vmatpush.bf16.msra.mxu0 %v823
        %845 = vmatpush.bf16.msra.mxu0 %v821
        %846 = vmatpush.bf16.msra.mxu0 %v819
        %847 = vmatpush.bf16.msra.mxu0 %v817
        %848 = vmatpush.bf16.msra.mxu0 %v815
        %849 = vmatpush.bf16.msra.mxu0 %v813
        %850 = vmatmul.bf16.gmra.mxu0 %v837
        %v851 = vpop.f32.mrf.mxu0
        %v852 = vadd.f32 0.0, %v851
        %v853 = vpop.f32.mrf.mxu0
        %v854 = vadd.f32 0.0, %v853
        %855 = vmatmul.bf16.gmra.mxu0 %v840
        %v856 = vpop.f32.mrf.mxu0
        %v857 = vadd.f32 0.0, %v856
        %v858 = vpop.f32.mrf.mxu0
        %859 = vdwg.mxu0
        %860 = vmatpush.bf16.msra.mxu0 0
        %861 = vmatpush.bf16.msra.mxu0 0
        %862 = vmatpush.bf16.msra.mxu0 %v824
        %863 = vmatpush.bf16.msra.mxu0 %v822
        %864 = vmatpush.bf16.msra.mxu0 %v820
        %865 = vmatpush.bf16.msra.mxu0 %v818
        %866 = vmatpush.bf16.msra.mxu0 %v816
        %867 = vmatpush.bf16.msra.mxu0 %v814
        %868 = vmatmul.bf16.gmra.mxu0 %v837
        %v869 = vpop.f32.mrf.mxu0
        %v870 = vadd.f32 0.0, %v869
        %v871 = vpop.f32.mrf.mxu0
        %v872 = vadd.f32 0.0, %v871
        %873 = vmatmul.bf16.gmra.mxu0 %v840
        %v874 = vpop.f32.mrf.mxu0
        %v875 = vadd.f32 0.0, %v874
        %v876 = vpop.f32.mrf.mxu0
        %877 = vdwg.mxu0
        %880 = vrot.lane.b32.xlu0 %v852, 16
        %v881 = vpop.permute.xlu0 %880
        %882 = vrot.lane.b32.xlu0 %v870, 16
        %v883 = vpop.permute.xlu0 %882
        %v884 = vsel %vm391, %v881, %v883
        %v887 = vsel %vm391, 0.0, %v881
        %v888 = vadd.f32 %v854, %v887
        %v889 = vadd.f32 %v872, %v884
        %892 = vrot.lane.b32.xlu0 %v857, 112
        %v893 = vpop.permute.xlu0 %892
        %894 = vrot.lane.b32.xlu0 %v875, 112
        %v895 = vpop.permute.xlu0 %894
        %v896 = vsel %vm602, %v893, %v895
        %v899 = vsel %vm602, %v895, 0.0
        %v900 = vadd.f32 %v888, %v896
        %v901 = vadd.f32 %v889, %v899
        %902 = vst [vmem:[%s616 + $0x20] sm:$0xff] %v900
        %903 = vst [vmem:[%s616 + $0x28] sm:$0xff] %v901
        %s904 = sand.u32 %s162, 1
        %s905 = scalar_lea.sflag [#allocation4], %s904
        %s906 = sand.u32 %s162, 1
        %s907 = smul.addr %s906, 96
        %s908 = scalar_lea.vmem [#allocation5], %s907
        // Predicated region
        $region49: #{tpu_custom_call.1} parent=43 // pred_check
          %p909 = pneg %p172
        $region50: #{tpu_custom_call.1} parent=43 // pred_check_branch
          %911 = sbr.rel (%p909) target = $region52
        $region51: #{tpu_custom_call.1} parent=43 // pred_region
          %s912 = smul.u32 2, %s23
          %914 = vsyncadd %s905, 0
          %s915 = smul.addr %s912, 6
          %s916 = smul.addr %s915, 8
          %s917 = scalar_lea.hbm %s6, %s916
          %s918 = sshll.u32 %s908, 4
          %s919 = int_to_ptr.vmem [resolvable:$true] %s918
          %s920 = sshll.u32 %s917, 4
          %s921 = int_to_ptr.hbm [resolvable:$true] %s920
          %926 = dma.vmem_to_hbm [thread:$0]  %s919, 1536, %s921, %s905, 256, 256, 16
        $region52: #{tpu_custom_call.1} parent=43 // pred_fallthru
          _
      $region44: #{tpu_custom_call.1} parent=5 // pred_fallthru
        _
      %p927 = scmp.le.s32.totalorder 2, %s18
      // Predicated region
      $region53: #{tpu_custom_call.1} parent=5 // pred_check
        %p928 = pneg %p927
      $region54: #{tpu_custom_call.1} parent=5 // pred_check_branch
        %930 = sbr.rel (%p928) target = $region56
      $region55: #{tpu_custom_call.1} parent=5 // pred_region
        %s931 = ssub.s32 %s18, 2
        // Predicated region
        $region57: #{tpu_custom_call.1} parent=55 // pred_check
          %p932 = pneg %p178
        $region58: #{tpu_custom_call.1} parent=55 // pred_check_branch
          %934 = sbr.rel (%p932) target = $region60
        $region59: #{tpu_custom_call.1} parent=55 // pred_region
          %s935 = sand.u32 %s163, 1
          %s936 = scalar_lea.sflag [#allocation4], %s935
          %s937 = sand.u32 %s163, 1
          %s938 = smul.addr %s937, 96
          %s939 = scalar_lea.vmem [#allocation5], %s938
          %941 = dma.done %s936, 1536
        $region60: #{tpu_custom_call.1} parent=55 // pred_fallthru
          _
      $region56: #{tpu_custom_call.1} parent=5 // pred_fallthru
        _
    $region6: #{tpu_custom_call.1} parent=1 // loop_footer
      %s22 = sadd.s32 1, %s18
    $region7: #{tpu_custom_call.1} parent=1 // loop_footer_branch
      %17 = sbr.rel target = $region3
    $region8: #{tpu_custom_call.1} parent=1 // loop_exit
      _
    %942 = vsyncpa [#allocation3], 1
    %s943 = scalar_lea.sflag [#allocation3], 1
    %944 = vsyncpa %s943, 1
    %945 = vsyncpa [#allocation4], 1
    %s946 = scalar_lea.sflag [#allocation4], 1
    %947 = vsyncpa %s946, 1

</llo_original>
